<compile_context>
chip_gen: v7x
topology: tpu7x:2x2x1
jax: 0.10.0
libtpu: 0.0.40
codegen_flags: <defaults>
</compile_context>

<pallas_src>
import functools

import jax
import jax.numpy as jnp
from jax import lax
from jax.experimental import pallas as pl
from jax.experimental.pallas import tpu as pltpu


def _attn_kernel(x_ref, ctxp_ref, bp_ref, ctx_ref, wc_ref, attn_ref, *, mm_dtype):
    # x_ref:    (1, idf, qT)        input tile, channels-first
    # ctxp_ref: (1, idf, sourceL)   W^T @ ctx   (fused projection, per batch)
    # bp_ref:   (1, sourceL, 1)     bias @ ctx  (per batch)
    # ctx_ref:  (1, cdf, sourceL)   raw context (per batch)
    # wc_ref:   (1, cdf, qT)        out: weighted context, already NCHW-flat
    # attn_ref: (1, sourceL, qT)    out: attn^T, already NCHW-flat
    f32 = jnp.float32
    x = x_ref[0].astype(mm_dtype)             # (idf, qT)
    ctx_proj = ctxp_ref[0].astype(mm_dtype)   # (idf, sourceL)
    b_proj = bp_ref[0].astype(f32)            # (sourceL, 1)
    ctx = ctx_ref[0].astype(mm_dtype)         # (cdf, sourceL)

    # Scores s^T = ctx_proj^T-contracted-with-x + b_proj  -> (sourceL, qT).
    # Contraction over idf via dot_general: no operand transpose materialized.
    s = lax.dot_general(ctx_proj, x, (((0,), (0,)), ((), ())),
                        preferred_element_type=f32) + b_proj

    # Softmax over sourceL (sublane axis); queryL fills the lanes.
    s = s - jnp.max(s, axis=0, keepdims=True)
    e = jnp.exp(s)
    attn = e * pl.reciprocal(jnp.sum(e, axis=0, keepdims=True), approx=False)

    # Weighted context: ctx @ attn^T -> (cdf, qT), f32 accumulation on MXU.
    wc = jnp.dot(ctx, attn.astype(mm_dtype), preferred_element_type=f32)

    wc_ref[0] = wc.astype(wc_ref.dtype)
    attn_ref[0] = attn.astype(attn_ref.dtype)


def _choose_q_tile(queryL, target=512):
    """Largest tile <= target that divides queryL and is a multiple of 128."""
    if queryL % 128 != 0:
        return queryL            # single full-extent block (always legal)
    t = min(target, queryL)
    while queryL % t:
        t -= 128
    return t


def global_attention_general(inp, context, weight, bias, *,
                             mm_dtype=jnp.float32, q_tile=None):
    """
    inp:     (B, idf, ih, iw)   float32
    context: (B, cdf, sourceL)  float32
    weight:  (cdf, idf)         Linear weight (PyTorch convention)
    bias:    (cdf,)             Linear bias
    Returns (weightedContext, attn) with PyTorch output shapes
        weightedContext: (B, cdf, ih, iw)
        attn:            (B, sourceL, ih, iw)
    """
    B, idf, ih, iw = inp.shape
    _, cdf, sourceL = context.shape
    queryL = ih * iw

    # Channels-first: the raw NCHW flatten, no transpose anywhere.
    x = inp.reshape(B, idf, queryL)                                   # (B, idf, qL)
    # Tiny per-batch fused-projection terms (O(B*idf*cdf*sourceL) flops).
    ctx_proj = jnp.einsum("ci,bcs->bis", weight, context)             # (B, idf, sL)
    b_proj = jnp.einsum("c,bcs->bs", bias, context)[..., None]        # (B, sL, 1)

    if q_tile is None:
        q_tile = _choose_q_tile(queryL)
    n_q = queryL // q_tile

    kernel = functools.partial(_attn_kernel, mm_dtype=mm_dtype)

    # Scheduling hint for XLA around the custom call.
    flops = int(2 * B * queryL * sourceL * (idf + cdf))
    bytes_accessed = int(4 * (x.size + ctx_proj.size + b_proj.size + context.size
                              + B * cdf * queryL + B * sourceL * queryL))
    cost = pl.CostEstimate(flops=flops,
                           transcendentals=int(B * queryL * sourceL),
                           bytes_accessed=bytes_accessed)

    grid_spec = pltpu.PrefetchScalarGridSpec(
        num_scalar_prefetch=0,
        grid=(B, n_q),
        in_specs=[
            pl.BlockSpec((1, idf, q_tile), lambda b, q: (b, 0, q)),
            pl.BlockSpec((1, idf, sourceL), lambda b, q: (b, 0, 0)),
            pl.BlockSpec((1, sourceL, 1), lambda b, q: (b, 0, 0)),
            pl.BlockSpec((1, cdf, sourceL), lambda b, q: (b, 0, 0)),
        ],
        out_specs=[
            pl.BlockSpec((1, cdf, q_tile), lambda b, q: (b, 0, q)),
            pl.BlockSpec((1, sourceL, q_tile), lambda b, q: (b, 0, q)),
        ],
    )

    wc, attn = pl.pallas_call(
        kernel,
        out_shape=(
            jax.ShapeDtypeStruct((B, cdf, queryL), jnp.float32),
            jax.ShapeDtypeStruct((B, sourceL, queryL), jnp.float32),
        ),
        grid_spec=grid_spec,
        compiler_params=pltpu.CompilerParams(
            dimension_semantics=("parallel", "parallel")),
        cost_estimate=cost,
    )(x, ctx_proj, b_proj, context)

    # Outputs are already in PyTorch layout; only view-style reshapes remain.
    return wc.reshape(B, cdf, ih, iw), attn.reshape(B, sourceL, ih, iw)


def _reference(inp, context, weight, bias):
    B, idf, ih, iw = inp.shape
    _, cdf, sourceL = context.shape
    queryL = ih * iw
    x = jnp.transpose(inp.reshape(B, idf, queryL), (0, 2, 1))        # (B, qL, idf)
    q = jnp.einsum("bqi,ci->bqc", x, weight) + bias                  # (B, qL, cdf)
    s = jnp.einsum("bqc,bcs->bqs", q, context)                       # (B, qL, sL)
    attn = jax.nn.softmax(s, axis=-1)
    wc = jnp.einsum("bcs,bqs->bcq", context, attn)                   # (B, cdf, qL)
    return (wc.reshape(B, cdf, ih, iw),
            jnp.transpose(attn, (0, 2, 1)).reshape(B, sourceL, ih, iw))


if __name__ == "__main__":
    key = jax.random.PRNGKey(0)
    B, idf, cdf, ih, iw, sourceL = 2, 4, 8, 16, 16, 8

    k1, k2, k3, k4 = jax.random.split(key, 4)
    inp = jax.random.normal(k1, (B, idf, ih, iw), dtype=jnp.float32)
    context = jax.random.normal(k2, (B, cdf, sourceL), dtype=jnp.float32)
    weight = jax.random.normal(k3, (cdf, idf), dtype=jnp.float32) * 0.5
    bias = jax.random.normal(k4, (cdf,), dtype=jnp.float32) * 0.1

    # TODO(synk): applyMask / masked_fill path not implemented (mask=None forward).
    wc, attn = global_attention_general(inp, context, weight, bias)
    jax.block_until_ready((wc, attn))

    wc_ref, attn_ref = _reference(inp, context, weight, bias)
    assert wc.shape == (B, cdf, ih, iw) and attn.shape == (B, sourceL, ih, iw)
    assert jnp.allclose(wc, wc_ref, atol=1e-4, rtol=1e-4)
    assert jnp.allclose(attn, attn_ref, atol=1e-5, rtol=1e-5)

    print("KERNEL_OK")
</pallas_src>

<mosaic_0001>
module attributes {stable_mosaic.version = 11 : i64} {
  func.func @_attn_kernel(%arg0: i32, %arg1: i32, %arg2: memref<1x4x256xf32, #tpu.memory_space<vmem>>, %arg3: memref<1x4x8xf32, #tpu.memory_space<vmem>>, %arg4: memref<1x8x1xf32, #tpu.memory_space<vmem>>, %arg5: memref<1x8x8xf32, #tpu.memory_space<vmem>>, %arg6: memref<1x8x256xf32, #tpu.memory_space<vmem>>, %arg7: memref<1x8x256xf32, #tpu.memory_space<vmem>>) attributes {dimension_semantics = [#tpu.dimension_semantics<parallel>, #tpu.dimension_semantics<parallel>], iteration_bounds = array<i64: 2, 1>, scalar_prefetch = 0 : i64, scratch_operands = 0 : i64, tpu.core_type = #tpu.core_type<tc>, window_params = [{transform_indices = @transform_0, window_bounds = array<i64: 1, 4, 256>}, {transform_indices = @transform_1, window_bounds = array<i64: 1, 4, 8>}, {transform_indices = @transform_2, window_bounds = array<i64: 1, 8, 1>}, {transform_indices = @transform_3, window_bounds = array<i64: 1, 8, 8>}, {transform_indices = @transform_4, window_bounds = array<i64: 1, 8, 256>}, {transform_indices = @transform_5, window_bounds = array<i64: 1, 8, 256>}]} {
    %c0 = arith.constant 0 : index
    %c0_0 = arith.constant 0 : index
    %c0_1 = arith.constant 0 : index
    %0 = vector.load %arg2[%c0, %c0_0, %c0_1] : memref<1x4x256xf32, #tpu.memory_space<vmem>>, vector<1x4x256xf32>
    %1 = vector.shape_cast %0 : vector<1x4x256xf32> to vector<4x256xf32>
    %c0_2 = arith.constant 0 : index
    %c0_3 = arith.constant 0 : index
    %c0_4 = arith.constant 0 : index
    %2 = vector.load %arg3[%c0_2, %c0_3, %c0_4] : memref<1x4x8xf32, #tpu.memory_space<vmem>>, vector<1x4x8xf32>
    %3 = vector.shape_cast %2 : vector<1x4x8xf32> to vector<4x8xf32>
    %c0_5 = arith.constant 0 : index
    %c0_6 = arith.constant 0 : index
    %c0_7 = arith.constant 0 : index
    %4 = vector.load %arg4[%c0_5, %c0_6, %c0_7] : memref<1x8x1xf32, #tpu.memory_space<vmem>>, vector<1x8x1xf32>
    %5 = vector.shape_cast %4 : vector<1x8x1xf32> to vector<8x1xf32>
    %c0_8 = arith.constant 0 : index
    %c0_9 = arith.constant 0 : index
    %c0_10 = arith.constant 0 : index
    %6 = vector.load %arg5[%c0_8, %c0_9, %c0_10] : memref<1x8x8xf32, #tpu.memory_space<vmem>>, vector<1x8x8xf32>
    %7 = vector.shape_cast %6 : vector<1x8x8xf32> to vector<8x8xf32>
    %cst = arith.constant dense<0.000000e+00> : vector<8x256xf32>
    %8 = tpu.matmul %3, %1, %cst {dimension_numbers = #tpu.dot_dimension_numbers<[0], [0], [1], [1], [0, 1, 1, 1], [], []>} : vector<4x8xf32>, vector<4x256xf32>, vector<8x256xf32> -> vector<8x256xf32>
    %9 = vector.broadcast %5 : vector<8x1xf32> to vector<8x256xf32>
    %10 = arith.addf %8, %9 : vector<8x256xf32>
    %cst_11 = arith.constant dense<0xFF800000> : vector<256xf32>
    %11 = vector.multi_reduction <maximumf>, %10, %cst_11 [0] : vector<8x256xf32> to vector<256xf32>
    %12 = vector.shape_cast %11 : vector<256xf32> to vector<1x256xf32>
    %13 = vector.broadcast %12 : vector<1x256xf32> to vector<8x256xf32>
    %14 = arith.subf %10, %13 : vector<8x256xf32>
    %15 = math.exp %14 : vector<8x256xf32>
    %cst_12 = arith.constant dense<0.000000e+00> : vector<256xf32>
    %16 = vector.multi_reduction <add>, %15, %cst_12 [0] : vector<8x256xf32> to vector<256xf32>
    %17 = vector.shape_cast %16 : vector<256xf32> to vector<1x256xf32>
    %18 = tpu.reciprocal %17 : vector<1x256xf32> -> vector<1x256xf32>
    %19 = vector.broadcast %18 : vector<1x256xf32> to vector<8x256xf32>
    %20 = arith.mulf %15, %19 : vector<8x256xf32>
    %cst_13 = arith.constant dense<0.000000e+00> : vector<8x256xf32>
    %21 = tpu.matmul %7, %20, %cst_13 {dimension_numbers = #tpu.dot_dimension_numbers<[1], [0], [0], [1], [0, 0, 1, 1], [], []>} : vector<8x8xf32>, vector<8x256xf32>, vector<8x256xf32> -> vector<8x256xf32>
    %c0_14 = arith.constant 0 : index
    %c0_15 = arith.constant 0 : index
    %c0_16 = arith.constant 0 : index
    %22 = vector.load %arg6[%c0_14, %c0_15, %c0_16] : memref<1x8x256xf32, #tpu.memory_space<vmem>>, vector<1x8x256xf32>
    %23 = vector.shape_cast %22 : vector<1x8x256xf32> to vector<8x256xf32>
    %24 = vector.shape_cast %21 : vector<8x256xf32> to vector<1x8x256xf32>
    tpu.vector_store %arg6[%c0_14, %c0_15, %c0_16], %24 {strides = array<i32>} : memref<1x8x256xf32, #tpu.memory_space<vmem>>, vector<1x8x256xf32>,
    %c0_17 = arith.constant 0 : index
    %c0_18 = arith.constant 0 : index
    %c0_19 = arith.constant 0 : index
    %25 = vector.load %arg7[%c0_17, %c0_18, %c0_19] : memref<1x8x256xf32, #tpu.memory_space<vmem>>, vector<1x8x256xf32>
    %26 = vector.shape_cast %25 : vector<1x8x256xf32> to vector<8x256xf32>
    %27 = vector.shape_cast %20 : vector<8x256xf32> to vector<1x8x256xf32>
    tpu.vector_store %arg7[%c0_17, %c0_18, %c0_19], %27 {strides = array<i32>} : memref<1x8x256xf32, #tpu.memory_space<vmem>>, vector<1x8x256xf32>,
    return
  }
  func.func @transform_0(%arg0: i32, %arg1: i32) -> (i32, i32, i32) {
    %c0_i32 = arith.constant 0 : i32
    %c0_i32_0 = arith.constant 0 : i32
    return %arg0, %c0_i32, %arg1 : i32, i32, i32
  }
  func.func @transform_1(%arg0: i32, %arg1: i32) -> (i32, i32, i32) {
    %c0_i32 = arith.constant 0 : i32
    %c0_i32_0 = arith.constant 0 : i32
    %c0_i32_1 = arith.constant 0 : i32
    return %arg0, %c0_i32, %c0_i32_0 : i32, i32, i32
  }
  func.func @transform_2(%arg0: i32, %arg1: i32) -> (i32, i32, i32) {
    %c0_i32 = arith.constant 0 : i32
    %c0_i32_0 = arith.constant 0 : i32
    %c0_i32_1 = arith.constant 0 : i32
    return %arg0, %c0_i32, %c0_i32_0 : i32, i32, i32
  }
  func.func @transform_3(%arg0: i32, %arg1: i32) -> (i32, i32, i32) {
    %c0_i32 = arith.constant 0 : i32
    %c0_i32_0 = arith.constant 0 : i32
    %c0_i32_1 = arith.constant 0 : i32
    return %arg0, %c0_i32, %c0_i32_0 : i32, i32, i32
  }
  func.func @transform_4(%arg0: i32, %arg1: i32) -> (i32, i32, i32) {
    %c0_i32 = arith.constant 0 : i32
    %c0_i32_0 = arith.constant 0 : i32
    return %arg0, %c0_i32, %arg1 : i32, i32, i32
  }
  func.func @transform_5(%arg0: i32, %arg1: i32) -> (i32, i32, i32) {
    %c0_i32 = arith.constant 0 : i32
    %c0_i32_0 = arith.constant 0 : i32
    return %arg0, %c0_i32, %arg1 : i32, i32, i32
  }
}

</mosaic_0001>

<llo_original>
// kernel: tpu_custom_call.1
$region0: #{tpu_custom_call.1}
  #allocation0 [shape = 'u32[]', space=smem, size = 0x4, offset = 0x4, fixed_abs, tag = 'smem constant byte address 0x4 - core index']
  #allocation1 [shape = 'u32[144,128]{1,0:T(1,128)}', space=vmem, size = 0x12000, scoped, tag = 'internal scratch']
  %s0 = inlined_call_operand.vmem [shape: f32[2,4,256], index: 0, kind: input, shape index: {}]
  %s1 = inlined_call_operand.hbm [shape: f32[2,4,8], index: 1, kind: input, shape index: {}]
  %s2 = inlined_call_operand.vmem [shape: f32[2,8,1], index: 2, kind: input, shape index: {}]
  %s3 = inlined_call_operand.hbm [shape: f32[2,8,8], index: 3, kind: input, shape index: {}]
  %s4 = inlined_call_operand.hbm [shape: f32[2,8,256], index: 4, kind: output, shape index: {0}]
  %s5 = inlined_call_operand.hbm [shape: f32[2,8,256], index: 5, kind: output, shape index: {1}]
  %6 = xla_tuple %s4, %s5
  %s7 = sld [smem:[#allocation0]]
  $region65: #{tpu_custom_call.1} parent=0
    _
  %s9 = ssub.s32 1, %s7
  %s10 = scalar_select 0, %s9, %s7
  $region1: #{tpu_custom_call.1} parent=0
    #allocation2 [shape = 'u8[4096]{0}', space=vmem, size = 0x1000, scoped, tag = 'input window, operand 1']
    #allocation3 [shape = 's32[2]{0}', space=sflag, size = 0x8, scoped, tag = 'scoped memory for tpu_custom_call.1']
    #allocation4 [shape = 's32[2]{0}', space=sflag, size = 0x8, scoped, tag = 'scoped memory for tpu_custom_call.1']
    #allocation5 [shape = 'u8[8192]{0}', space=vmem, size = 0x2000, scoped, tag = 'input window, operand 3']
    #allocation6 [shape = 's32[2]{0}', space=sflag, size = 0x8, scoped, tag = 'scoped memory for tpu_custom_call.1']
    #allocation7 [shape = 'u8[16384]{0}', space=vmem, size = 0x4000, scoped, tag = 'output window, operand 0']
    #allocation8 [shape = 'u8[16384]{0}', space=vmem, size = 0x4000, scoped, tag = 'output window, operand 1']
    #allocation9 [shape = 's32[2]{0}', space=sflag, size = 0x8, scoped, tag = 'scoped memory for tpu_custom_call.1']
    %11 = vsyncpa [#allocation3], 0
    %s12 = scalar_lea.sflag [#allocation3], 1
    %13 = vsyncpa %s12, 0
    %14 = vsyncpa [#allocation6], 0
    %s15 = scalar_lea.sflag [#allocation6], 1
    %16 = vsyncpa %s15, 0
    %17 = vsyncpa [#allocation4], 0
    %s18 = scalar_lea.sflag [#allocation4], 1
    %19 = vsyncpa %s18, 0
    %20 = vsyncpa [#allocation9], 0
    %s21 = scalar_lea.sflag [#allocation9], 1
    %22 = vsyncpa %s21, 0
    loop: start=0, step=1, limit=4
    $region2: #{tpu_custom_call.1} parent=1 // loop_pre_header
      _
    $region3: #{tpu_custom_call.1} parent=1 // loop_header
      %s24 = sphi 0, %s28
      %p25 = scmp.ge.s32.totalorder %s24, 4
      %s31 = sphi 0, %s43
      %s32 = sphi 0, %s39
      %s33 = sphi 0, %s31
      %s34 = sphi 0, %s32
      %s35 = sphi 0, %s33
      %s36 = sphi 0, %s34
      %s48 = sphi 0, %s50
      %s51 = sphi 0, %s48
      %s52 = sphi 0, %s51
      %s68 = sphi 0, %s52
      %s74 = sphi 0, %s76
      %s77 = sphi 0, %s74
      %s78 = sphi 0, %s77
      %s94 = sphi 0, %s78
      %s100 = sphi 0, %s102
      %s103 = sphi 0, %s100
      %s104 = sphi 0, %s103
      %s120 = sphi 0, %s104
      %s126 = sphi 0, %s128
      %s129 = sphi 0, %s126
      %s130 = sphi 0, %s129
      %s146 = sphi 0, %s130
      %s154 = sphi 0, %s156
      %s157 = sphi 0, %s154
      %s158 = sphi 0, %s157
      %s174 = sphi 0, %s158
      %s182 = sphi 0, %s184
      %s185 = sphi 0, %s182
      %s186 = sphi 0, %s185
      %s202 = sphi 0, %s186
    $region4: #{tpu_custom_call.1} parent=1 // loop_header_branch
      %27 = sbr.rel (%p25) target = $region8
    $region5: #{tpu_custom_call.1} parent=1 // loop_body
      %s29 = ssub.s32 %s24, 1
      %s30 = ssub.s32 %s24, 2
      %s37 = sadd.s32 1, %s32
      %p38 = scmp.ge.s32.totalorder %s37, 1
      %s39 = scalar_select %p38, 0, %s37
      %s40 = sadd.s32 1, %s31
      %s41 = scalar_select %p38, %s40, %s31
      %p42 = scmp.ge.s32.totalorder %s41, 2
      %s43 = scalar_select %p42, 0, %s41
      %s44 = ssub.s32 %s31, %s43
      %s45 = ssub.s32 %s32, %s39
      %s46 = sor.u32 %s44, %s45
      %p47 = scmp.eq.s32.totalorder %s46, 0
      %s49 = sadd.s32 %s48, 1
      %s50 = scalar_select %p47, %s48, %s49
      %p53 = pneg %p47
      %p54 = scmp.eq.s32.totalorder %s24, 1
      %p55 = por %p53, %p54
      %p56 = scmp.ne.s32.totalorder %s48, %s51
      %p57 = scmp.eq.s32.totalorder %s24, 0
      %p58 = por %p56, %p57
      %p59 = scmp.ne.s32.totalorder %s48, %s51
      %p60 = scmp.eq.s32.totalorder %s29, 1
      %p61 = por %p59, %p60
      %p62 = scmp.ne.s32.totalorder %s51, %s52
      %p63 = scmp.eq.s32.totalorder %s29, 0
      %p64 = por %p62, %p63
      %p65 = scmp.ne.s32.totalorder %s51, %s52
      %p66 = scmp.eq.s32.totalorder %s30, 1
      %p67 = por %p65, %p66
      %p69 = scmp.ne.s32.totalorder %s52, %s68
      %p70 = scmp.eq.s32.totalorder %s30, 0
      %p71 = por %p69, %p70
      %s72 = ssub.s32 %s31, %s43
      %p73 = scmp.eq.s32.totalorder %s72, 0
      %s75 = sadd.s32 %s74, 1
      %s76 = scalar_select %p73, %s74, %s75
      %p79 = pneg %p73
      %p80 = scmp.eq.s32.totalorder %s24, 1
      %p81 = por %p79, %p80
      %p82 = scmp.ne.s32.totalorder %s74, %s77
      %p83 = scmp.eq.s32.totalorder %s24, 0
      %p84 = por %p82, %p83
      %p85 = scmp.ne.s32.totalorder %s74, %s77
      %p86 = scmp.eq.s32.totalorder %s29, 1
      %p87 = por %p85, %p86
      %p88 = scmp.ne.s32.totalorder %s77, %s78
      %p89 = scmp.eq.s32.totalorder %s29, 0
      %p90 = por %p88, %p89
      %p91 = scmp.ne.s32.totalorder %s77, %s78
      %p92 = scmp.eq.s32.totalorder %s30, 1
      %p93 = por %p91, %p92
      %p95 = scmp.ne.s32.totalorder %s78, %s94
      %p96 = scmp.eq.s32.totalorder %s30, 0
      %p97 = por %p95, %p96
      %s98 = ssub.s32 %s31, %s43
      %p99 = scmp.eq.s32.totalorder %s98, 0
      %s101 = sadd.s32 %s100, 1
      %s102 = scalar_select %p99, %s100, %s101
      %p105 = pneg %p99
      %p106 = scmp.eq.s32.totalorder %s24, 1
      %p107 = por %p105, %p106
      %p108 = scmp.ne.s32.totalorder %s100, %s103
      %p109 = scmp.eq.s32.totalorder %s24, 0
      %p110 = por %p108, %p109
      %p111 = scmp.ne.s32.totalorder %s100, %s103
      %p112 = scmp.eq.s32.totalorder %s29, 1
      %p113 = por %p111, %p112
      %p114 = scmp.ne.s32.totalorder %s103, %s104
      %p115 = scmp.eq.s32.totalorder %s29, 0
      %p116 = por %p114, %p115
      %p117 = scmp.ne.s32.totalorder %s103, %s104
      %p118 = scmp.eq.s32.totalorder %s30, 1
      %p119 = por %p117, %p118
      %p121 = scmp.ne.s32.totalorder %s104, %s120
      %p122 = scmp.eq.s32.totalorder %s30, 0
      %p123 = por %p121, %p122
      %s124 = ssub.s32 %s31, %s43
      %p125 = scmp.eq.s32.totalorder %s124, 0
      %s127 = sadd.s32 %s126, 1
      %s128 = scalar_select %p125, %s126, %s127
      %p131 = pneg %p125
      %p132 = scmp.eq.s32.totalorder %s24, 1
      %p133 = por %p131, %p132
      %p134 = scmp.ne.s32.totalorder %s126, %s129
      %p135 = scmp.eq.s32.totalorder %s24, 0
      %p136 = por %p134, %p135
      %p137 = scmp.ne.s32.totalorder %s126, %s129
      %p138 = scmp.eq.s32.totalorder %s29, 1
      %p139 = por %p137, %p138
      %p140 = scmp.ne.s32.totalorder %s129, %s130
      %p141 = scmp.eq.s32.totalorder %s29, 0
      %p142 = por %p140, %p141
      %p143 = scmp.ne.s32.totalorder %s129, %s130
      %p144 = scmp.eq.s32.totalorder %s30, 1
      %p145 = por %p143, %p144
      %p147 = scmp.ne.s32.totalorder %s130, %s146
      %p148 = scmp.eq.s32.totalorder %s30, 0
      %p149 = por %p147, %p148
      %s150 = ssub.s32 %s31, %s43
      %s151 = ssub.s32 %s32, %s39
      %s152 = sor.u32 %s150, %s151
      %p153 = scmp.eq.s32.totalorder %s152, 0
      %s155 = sadd.s32 %s154, 1
      %s156 = scalar_select %p153, %s154, %s155
      %p159 = pneg %p153
      %p160 = scmp.eq.s32.totalorder %s24, 1
      %p161 = por %p159, %p160
      %p162 = scmp.ne.s32.totalorder %s154, %s157
      %p163 = scmp.eq.s32.totalorder %s24, 0
      %p164 = por %p162, %p163
      %p165 = scmp.ne.s32.totalorder %s154, %s157
      %p166 = scmp.eq.s32.totalorder %s29, 1
      %p167 = por %p165, %p166
      %p168 = scmp.ne.s32.totalorder %s157, %s158
      %p169 = scmp.eq.s32.totalorder %s29, 0
      %p170 = por %p168, %p169
      %p171 = scmp.ne.s32.totalorder %s157, %s158
      %p172 = scmp.eq.s32.totalorder %s30, 1
      %p173 = por %p171, %p172
      %p175 = scmp.ne.s32.totalorder %s158, %s174
      %p176 = scmp.eq.s32.totalorder %s30, 0
      %p177 = por %p175, %p176
      %s178 = ssub.s32 %s31, %s43
      %s179 = ssub.s32 %s32, %s39
      %s180 = sor.u32 %s178, %s179
      %p181 = scmp.eq.s32.totalorder %s180, 0
      %s183 = sadd.s32 %s182, 1
      %s184 = scalar_select %p181, %s182, %s183
      %p187 = pneg %p181
      %p188 = scmp.eq.s32.totalorder %s24, 1
      %p189 = por %p187, %p188
      %p190 = scmp.ne.s32.totalorder %s182, %s185
      %p191 = scmp.eq.s32.totalorder %s24, 0
      %p192 = por %p190, %p191
      %p193 = scmp.ne.s32.totalorder %s182, %s185
      %p194 = scmp.eq.s32.totalorder %s29, 1
      %p195 = por %p193, %p194
      %p196 = scmp.ne.s32.totalorder %s185, %s186
      %p197 = scmp.eq.s32.totalorder %s29, 0
      %p198 = por %p196, %p197
      %p199 = scmp.ne.s32.totalorder %s185, %s186
      %p200 = scmp.eq.s32.totalorder %s30, 1
      %p201 = por %p199, %p200
      %p203 = scmp.ne.s32.totalorder %s186, %s202
      %p204 = scmp.eq.s32.totalorder %s30, 0
      %p205 = por %p203, %p204
      %p206 = scmp.le.s32.totalorder 1, %s24
      %p207 = scmp.lt.s32.totalorder %s24, 3
      %p208 = pnand %p206, %p207
      %p209 = pneg %p208
      // Predicated region
      $region9: #{tpu_custom_call.1} parent=5 // pred_check
        _
      $region10: #{tpu_custom_call.1} parent=5 // pred_check_branch
        %211 = sbr.rel (%p208) target = $region12
      $region11: #{tpu_custom_call.1} parent=5 // pred_region
        %s212 = ssub.s32 %s24, 1
      $region12: #{tpu_custom_call.1} parent=5 // pred_fallthru
        _
      %p213 = scmp.lt.s32.totalorder %s24, 2
      // Predicated region
      $region13: #{tpu_custom_call.1} parent=5 // pred_check
        %p214 = pneg %p213
      $region14: #{tpu_custom_call.1} parent=5 // pred_check_branch
        %216 = sbr.rel (%p214) target = $region16
      $region15: #{tpu_custom_call.1} parent=5 // pred_region
        // Predicated region
        $region17: #{tpu_custom_call.1} parent=15 // pred_check
          %p217 = pneg %p58
        $region18: #{tpu_custom_call.1} parent=15 // pred_check_branch
          %219 = sbr.rel (%p217) target = $region20
        $region19: #{tpu_custom_call.1} parent=15 // pred_region
          %s220 = smul.u32 2, %s32
          %p221 = scmp.lt.s32.totalorder %s31, 1
          %s222 = scalar_select %p221, %s31, 1
          %p223 = scmp.lt.s32.totalorder %s220, 1
          %s224 = scalar_select %p223, %s220, 1
          %s225 = smul.addr %s222, 2
          %s226 = sadd.s32 %s224, %s225
          %s227 = smul.addr %s226, 4
          %s228 = scalar_lea.vmem %s0, %s227
          %s229 = smul.u32 2, %s32
        $region20: #{tpu_custom_call.1} parent=15 // pred_fallthru
          _
        // Predicated region
        $region21: #{tpu_custom_call.1} parent=15 // pred_check
          %p230 = pneg %p84
        $region22: #{tpu_custom_call.1} parent=15 // pred_check_branch
          %232 = sbr.rel (%p230) target = $region24
        $region23: #{tpu_custom_call.1} parent=15 // pred_region
          %s233 = sand.u32 %s74, 1
          %s234 = scalar_lea.sflag [#allocation3], %s233
          %s235 = sand.u32 %s74, 1
          %s236 = smul.addr %s235, 4
          %s237 = scalar_lea.vmem [#allocation2], %s236
          %s239 = ssub.s32 64, 64
          %240 = vsyncadd %s234, %s239
          %s241 = smul.addr %s31, 64
          %s242 = scalar_lea.hbm %s1, %s241
          %s244 = sshll.u32 %s237, 4
          %s245 = int_to_ptr.vmem [resolvable:$true] %s244
          %247 = dma.hbm_to_vmem [thread:$0]  %s242, 64, %s245, %s234
        $region24: #{tpu_custom_call.1} parent=15 // pred_fallthru
          _
        // Predicated region
        $region25: #{tpu_custom_call.1} parent=15 // pred_check
          %p248 = pneg %p110
        $region26: #{tpu_custom_call.1} parent=15 // pred_check_branch
          %250 = sbr.rel (%p248) target = $region28
        $region27: #{tpu_custom_call.1} parent=15 // pred_region
          %p251 = scmp.lt.s32.totalorder %s31, 1
          %s252 = scalar_select %p251, %s31, 1
          %s253 = smul.addr %s252, 8
          %s254 = scalar_lea.vmem %s2, %s253
        $region28: #{tpu_custom_call.1} parent=15 // pred_fallthru
          _
        // Predicated region
        $region29: #{tpu_custom_call.1} parent=15 // pred_check
          %p255 = pneg %p136
        $region30: #{tpu_custom_call.1} parent=15 // pred_check_branch
          %257 = sbr.rel (%p255) target = $region32
        $region31: #{tpu_custom_call.1} parent=15 // pred_region
          %s258 = sand.u32 %s126, 1
          %s259 = scalar_lea.sflag [#allocation6], %s258
          %s260 = sand.u32 %s126, 1
          %s261 = smul.addr %s260, 8
          %s262 = scalar_lea.vmem [#allocation5], %s261
          %s264 = ssub.s32 128, 128
          %265 = vsyncadd %s259, %s264
          %s266 = smul.addr %s31, 128
          %s267 = scalar_lea.hbm %s3, %s266
          %s269 = sshll.u32 %s262, 4
          %s270 = int_to_ptr.vmem [resolvable:$true] %s269
          %272 = dma.hbm_to_vmem [thread:$0]  %s267, 128, %s270, %s259
        $region32: #{tpu_custom_call.1} parent=15 // pred_fallthru
          _
      $region16: #{tpu_custom_call.1} parent=5 // pred_fallthru
        _
      %p273 = scmp.le.s32.totalorder 1, %s24
      %p274 = scmp.lt.s32.totalorder %s24, 3
      %p275 = pnand %p273, %p274
      %p276 = pneg %p275
      // Predicated region
      $region33: #{tpu_custom_call.1} parent=5 // pred_check
        _
      $region34: #{tpu_custom_call.1} parent=5 // pred_check_branch
        %278 = sbr.rel (%p275) target = $region36
      $region35: #{tpu_custom_call.1} parent=5 // pred_region
        %s279 = ssub.s32 %s24, 1
        %s280 = sand.u32 %s77, 1
        %s281 = scalar_lea.sflag [#allocation3], %s280
        %s282 = sand.u32 %s77, 1
        %s283 = smul.addr %s282, 4
        %s284 = scalar_lea.vmem [#allocation2], %s283
        // Predicated region
        $region37: #{tpu_custom_call.1} parent=35 // pred_check
          %p285 = pneg %p90
        $region38: #{tpu_custom_call.1} parent=35 // pred_check_branch
          %287 = sbr.rel (%p285) target = $region40
        $region39: #{tpu_custom_call.1} parent=35 // pred_region
          %288 = dma.done %s281, 64
        $region40: #{tpu_custom_call.1} parent=35 // pred_fallthru
          _
        %s289 = sand.u32 %s129, 1
        %s290 = scalar_lea.sflag [#allocation6], %s289
        %s291 = sand.u32 %s129, 1
        %s292 = smul.addr %s291, 8
        %s293 = scalar_lea.vmem [#allocation5], %s292
        // Predicated region
        $region41: #{tpu_custom_call.1} parent=35 // pred_check
          %p294 = pneg %p142
        $region42: #{tpu_custom_call.1} parent=35 // pred_check_branch
          %296 = sbr.rel (%p294) target = $region44
        $region43: #{tpu_custom_call.1} parent=35 // pred_region
          %297 = dma.done %s290, 128
        $region44: #{tpu_custom_call.1} parent=35 // pred_fallthru
          _
        %s298 = smul.u32 2, %s34
        %p299 = scmp.lt.s32.totalorder %s33, 1
        %s300 = scalar_select %p299, %s33, 1
        %p301 = scmp.lt.s32.totalorder %s298, 1
        %s302 = scalar_select %p301, %s298, 1
        %s303 = smul.addr %s300, 2
        %s304 = sadd.s32 %s302, %s303
        %s305 = smul.addr %s304, 4
        %s306 = scalar_lea.vmem %s0, %s305
        %p307 = pneg %p64
        %p308 = pneg %p61
        %s309 = sand.u32 %s77, 1
        %s310 = scalar_lea.sflag [#allocation3], %s309
        %s311 = sand.u32 %s77, 1
        %s312 = smul.addr %s311, 4
        %s313 = scalar_lea.vmem [#allocation2], %s312
        %p314 = pneg %p90
        %p315 = pneg %p87
        %p316 = scmp.lt.s32.totalorder %s33, 1
        %s317 = scalar_select %p316, %s33, 1
        %s318 = smul.addr %s317, 8
        %s319 = scalar_lea.vmem %s2, %s318
        %p320 = pneg %p116
        %p321 = pneg %p113
        %s322 = sand.u32 %s129, 1
        %s323 = scalar_lea.sflag [#allocation6], %s322
        %s324 = sand.u32 %s129, 1
        %s325 = smul.addr %s324, 8
        %s326 = scalar_lea.vmem [#allocation5], %s325
        %p327 = pneg %p142
        %p328 = pneg %p139
        %p329 = pneg %p170
        %p330 = pneg %p167
        %s331 = sand.u32 %s157, 1
        %s332 = scalar_lea.sflag [#allocation4], %s331
        %s333 = sand.u32 %s157, 1
        %s334 = smul.addr %s333, 16
        %s335 = scalar_lea.vmem [#allocation7], %s334
        %p336 = pneg %p198
        %p337 = pneg %p195
        %s338 = sand.u32 %s185, 1
        %s339 = scalar_lea.sflag [#allocation9], %s338
        %s340 = sand.u32 %s185, 1
        %s341 = smul.addr %s340, 16
        %s342 = scalar_lea.vmem [#allocation8], %s341
        %s343 = smul.u32 2, %s34
        %p344 = scmp.lt.s32.totalorder %s33, 1
        %s345 = scalar_select %p344, %s33, 1
        %p346 = scmp.lt.s32.totalorder %s343, 1
        %s347 = scalar_select %p346, %s343, 1
        %s348 = smul.addr %s345, 2
        %s349 = sadd.s32 %s347, %s348
        %s350 = smul.addr %s349, 4
        %s351 = scalar_lea.vmem %s0, %s350
        %s352 = smul.u32 2, %s34
        %p353 = scmp.lt.s32.totalorder %s33, 1
        %s354 = scalar_select %p353, %s33, 1
        %s355 = smul.addr %s354, 8
        %s356 = scalar_lea.vmem %s2, %s355
        %s357 = smul.u32 2, %s34
        %s358 = smul.u32 2, %s34
        %v359 = vld [vmem:[%s351] sm:$0xff]
        %v360 = vld [vmem:[%s284] sm:$0xf]
        %v361 = vld [vmem:[%s356] sm:$0xff]
        %v362 = vld [vmem:[%s293] sm:$0xff]
        %364 = vset.pattern.permute.xlu0 0
        %365 = vperm.xlu0 %364, %v361
        %v366 = vpop.permute.xlu0 %365
        %368 = vxpose.xlu0.b32.start [1/16] %v360, 128
        %369 = vxpose.xlu0.b32.cont [2/16] 0.0, 128
        %370 = vxpose.xlu0.b32.cont [3/16] 0.0, 128
        %371 = vxpose.xlu0.b32.cont [4/16] 0.0, 128
        %372 = vxpose.xlu0.b32.cont [5/16] 0.0, 128
        %373 = vxpose.xlu0.b32.cont [6/16] 0.0, 128
        %374 = vxpose.xlu0.b32.cont [7/16] 0.0, 128
        %375 = vxpose.xlu0.b32.cont [8/16] 0.0, 128
        %376 = vxpose.xlu0.b32.cont [9/16] 0.0, 128
        %377 = vxpose.xlu0.b32.cont [10/16] 0.0, 128
        %378 = vxpose.xlu0.b32.cont [11/16] 0.0, 128
        %379 = vxpose.xlu0.b32.cont [12/16] 0.0, 128
        %380 = vxpose.xlu0.b32.cont [13/16] 0.0, 128
        %381 = vxpose.xlu0.b32.cont [14/16] 0.0, 128
        %382 = vxpose.xlu0.b32.cont [15/16] 0.0, 128
        %383 = vxpose.xlu0.b32.end [16/16] 0.0, 128
        %v384 = vpop.trf.xlu0
        %v385 = vpop.trf.xlu0
        %v386 = vpop.trf.xlu0
        %v387 = vpop.trf.xlu0
        %v388 = vpop.trf.xlu0
        %v389 = vpop.trf.xlu0
        %v390 = vpop.trf.xlu0
        %v391 = vpop.trf.xlu0
        %v392 = vpop.trf.xlu0
        %v393 = vpop.trf.xlu0
        %v394 = vpop.trf.xlu0
        %v395 = vpop.trf.xlu0
        %v396 = vpop.trf.xlu0
        %v397 = vpop.trf.xlu0
        %v398 = vpop.trf.xlu0
        %v399 = vpop.trf.xlu0
        %v401 = vcombine.high %v359, %v359
        %vm402 = vcmask 31744
        %v404 = vsel %vm402, %v384, 0
        %vm406 = vcmask 1043456
        %v407 = vsel %vm406, %v359, 0
        %v409 = vsel %vm406, %v401, 0
        %411 = vmatprep.subr.mxu0 %v409
        %412 = vmatpush1.msra.mxu0 %v407
        %413 = vmatprep.subr.mxu0 0.0
        %414 = vmatpush1.msra.mxu0 0.0
        %415 = vmatprep.subr.mxu0 0.0
        %416 = vmatpush1.msra.mxu0 0.0
        %417 = vmatprep.subr.mxu0 0.0
        %418 = vmatpush1.msra.mxu0 0.0
        %419 = vmatprep.subr.mxu0 0.0
        %420 = vmatpush1.msra.mxu0 0.0
        %421 = vmatprep.subr.mxu0 0.0
        %422 = vmatpush1.msra.mxu0 0.0
        %423 = vmatprep.subr.mxu0 0.0
        %424 = vmatpush1.msra.mxu0 0.0
        %425 = vmatprep.subr.mxu0 0.0
        %426 = vmatpush1.msra.mxu0 0.0
        %427 = vmatprep.subr.mxu0 0.0
        %428 = vmatpush1.msra.mxu0 0.0
        %429 = vmatprep.subr.mxu0 0.0
        %430 = vmatpush1.msra.mxu0 0.0
        %431 = vmatprep.subr.mxu0 0.0
        %432 = vmatpush1.msra.mxu0 0.0
        %433 = vmatprep.subr.mxu0 0.0
        %434 = vmatpush1.msra.mxu0 0.0
        %435 = vmatprep.subr.mxu0 0.0
        %436 = vmatpush1.msra.mxu0 0.0
        %437 = vmatprep.subr.mxu0 0.0
        %438 = vmatpush1.msra.mxu0 0.0
        %439 = vmatprep.subr.mxu0 0.0
        %440 = vmatpush1.msra.mxu0 0.0
        %441 = vmatprep.subr.mxu0 0.0
        %442 = vmatpush1.msra.mxu0 0.0
        %443 = vmatprep.subr.mxu0 0.0
        %444 = vmatpush1.msra.mxu0 0.0
        %445 = vmatprep.subr.mxu0 0.0
        %446 = vmatpush1.msra.mxu0 0.0
        %447 = vmatprep.subr.mxu0 0.0
        %448 = vmatpush1.msra.mxu0 0.0
        %449 = vmatprep.subr.mxu0 0.0
        %450 = vmatpush1.msra.mxu0 0.0
        %451 = vmatprep.subr.mxu0 0.0
        %452 = vmatpush1.msra.mxu0 0.0
        %453 = vmatprep.subr.mxu0 0.0
        %454 = vmatpush1.msra.mxu0 0.0
        %455 = vmatprep.subr.mxu0 0.0
        %456 = vmatpush1.msra.mxu0 0.0
        %457 = vmatprep.subr.mxu0 0.0
        %458 = vmatpush1.msra.mxu0 0.0
        %459 = vmatprep.subr.mxu0 0.0
        %460 = vmatpush1.msra.mxu0 0.0
        %461 = vmatprep.subr.mxu0 0.0
        %462 = vmatpush1.msra.mxu0 0.0
        %463 = vmatprep.subr.mxu0 0.0
        %464 = vmatpush1.msra.mxu0 0.0
        %465 = vmatprep.subr.mxu0 0.0
        %466 = vmatpush1.msra.mxu0 0.0
        %467 = vmatprep.subr.mxu0 0.0
        %468 = vmatpush1.msra.mxu0 0.0
        %469 = vmatprep.subr.mxu0 0.0
        %470 = vmatpush1.msra.mxu0 0.0
        %471 = vmatprep.subr.mxu0 0.0
        %472 = vmatpush1.msra.mxu0 0.0
        %473 = vmatprep.subr.mxu0 0.0
        %474 = vmatpush1.msra.mxu0 0.0
        %475 = vmatprep.mubr.f32.mxu0 0.0
        %476 = vmatmul.mubr.f32.gmra.mrb[0].mxu0 %v404
        %v477 = vpop.f32.mrb[0].mxu0
        %v478 = vadd.f32 %v366, %v477
        %v479 = vpop.f32.mrb[0].mxu0
        %v480 = vadd.f32 %v366, %v479
        %481 = vdwg.mxu0
        %v482 = vrot.slane %v478, 4
        %v483 = vmax.f32 %v478, %v482
        %v484 = vrot.slane %v483, 2
        %v485 = vmax.f32 %v483, %v484
        %v486 = vrot.slane %v485, 1
        %v487 = vmax.f32 %v485, %v486
        %v488 = vrot.slane %v480, 4
        %v489 = vmax.f32 %v480, %v488
        %v490 = vrot.slane %v489, 2
        %v491 = vmax.f32 %v489, %v490
        %v492 = vrot.slane %v491, 1
        %v493 = vmax.f32 %v491, %v492
        %v494 = vsub.f32 %v478, %v487
        %v495 = vsub.f32 %v480, %v493
        %v496 = vmul.f32 %v494, 1.442695
        %v497 = vpow.pop %v496
        %v498 = vmul.f32 %v495, 1.442695
        %v499 = vpow.pop %v498
        %v500 = vrot.slane %v497, 4
        %v501 = vadd.f32 %v497, %v500
        %v502 = vrot.slane %v501, 2
        %v503 = vadd.f32 %v501, %v502
        %v504 = vrot.slane %v503, 1
        %v505 = vadd.f32 %v503, %v504
        %v506 = vrot.slane %v499, 4
        %v507 = vadd.f32 %v499, %v506
        %v508 = vrot.slane %v507, 2
        %v509 = vadd.f32 %v507, %v508
        %v510 = vrot.slane %v509, 1
        %v511 = vadd.f32 %v509, %v510
        %v512 = vrcp.pop %v505
        %v513 = vrcp.pop %v511
        %v514 = vmul.f32 %v497, %v512
        %v515 = vmul.f32 %v499, %v513
        %vm516 = vcmask 64512
        %v518 = vsel %vm516, %v362, 0
        %520 = vmatprep.subr.mxu0 %v515
        %521 = vmatpush1.msra.mxu0 %v514
        %522 = vmatprep.subr.mxu0 0.0
        %523 = vmatpush1.msra.mxu0 0.0
        %524 = vmatprep.subr.mxu0 0.0
        %525 = vmatpush1.msra.mxu0 0.0
        %526 = vmatprep.subr.mxu0 0.0
        %527 = vmatpush1.msra.mxu0 0.0
        %528 = vmatprep.subr.mxu0 0.0
        %529 = vmatpush1.msra.mxu0 0.0
        %530 = vmatprep.subr.mxu0 0.0
        %531 = vmatpush1.msra.mxu0 0.0
        %532 = vmatprep.subr.mxu0 0.0
        %533 = vmatpush1.msra.mxu0 0.0
        %534 = vmatprep.subr.mxu0 0.0
        %535 = vmatpush1.msra.mxu0 0.0
        %536 = vmatprep.subr.mxu0 0.0
        %537 = vmatpush1.msra.mxu0 0.0
        %538 = vmatprep.subr.mxu0 0.0
        %539 = vmatpush1.msra.mxu0 0.0
        %540 = vmatprep.subr.mxu0 0.0
        %541 = vmatpush1.msra.mxu0 0.0
        %542 = vmatprep.subr.mxu0 0.0
        %543 = vmatpush1.msra.mxu0 0.0
        %544 = vmatprep.subr.mxu0 0.0
        %545 = vmatpush1.msra.mxu0 0.0
        %546 = vmatprep.subr.mxu0 0.0
        %547 = vmatpush1.msra.mxu0 0.0
        %548 = vmatprep.subr.mxu0 0.0
        %549 = vmatpush1.msra.mxu0 0.0
        %550 = vmatprep.subr.mxu0 0.0
        %551 = vmatpush1.msra.mxu0 0.0
        %552 = vmatprep.subr.mxu0 0.0
        %553 = vmatpush1.msra.mxu0 0.0
        %554 = vmatprep.subr.mxu0 0.0
        %555 = vmatpush1.msra.mxu0 0.0
        %556 = vmatprep.subr.mxu0 0.0
        %557 = vmatpush1.msra.mxu0 0.0
        %558 = vmatprep.subr.mxu0 0.0
        %559 = vmatpush1.msra.mxu0 0.0
        %560 = vmatprep.subr.mxu0 0.0
        %561 = vmatpush1.msra.mxu0 0.0
        %562 = vmatprep.subr.mxu0 0.0
        %563 = vmatpush1.msra.mxu0 0.0
        %564 = vmatprep.subr.mxu0 0.0
        %565 = vmatpush1.msra.mxu0 0.0
        %566 = vmatprep.subr.mxu0 0.0
        %567 = vmatpush1.msra.mxu0 0.0
        %568 = vmatprep.subr.mxu0 0.0
        %569 = vmatpush1.msra.mxu0 0.0
        %570 = vmatprep.subr.mxu0 0.0
        %571 = vmatpush1.msra.mxu0 0.0
        %572 = vmatprep.subr.mxu0 0.0
        %573 = vmatpush1.msra.mxu0 0.0
        %574 = vmatprep.subr.mxu0 0.0
        %575 = vmatpush1.msra.mxu0 0.0
        %576 = vmatprep.subr.mxu0 0.0
        %577 = vmatpush1.msra.mxu0 0.0
        %578 = vmatprep.subr.mxu0 0.0
        %579 = vmatpush1.msra.mxu0 0.0
        %580 = vmatprep.subr.mxu0 0.0
        %581 = vmatpush1.msra.mxu0 0.0
        %582 = vmatprep.subr.mxu0 0.0
        %583 = vmatpush1.msra.mxu0 0.0
        %584 = vmatprep.mubr.f32.mxu0 0.0
        %585 = vmatmul.mubr.f32.gmra.mrb[0].mxu0 %v518
        %v586 = vpop.f32.mrb[0].mxu0
        %v587 = vadd.f32 0.0, %v586
        %v588 = vpop.f32.mrb[0].mxu0
        %v589 = vadd.f32 0.0, %v588
        %590 = vdwg.mxu0
        %591 = vst [vmem:[%s335] sm:$0xff] %v587
        %592 = vst [vmem:[%s335 + $0x8] sm:$0xff] %v589
        %593 = vst [vmem:[%s342] sm:$0xff] %v514
        %594 = vst [vmem:[%s342 + $0x8] sm:$0xff] %v515
        %s595 = sand.u32 %s157, 1
        %s596 = scalar_lea.sflag [#allocation4], %s595
        %s597 = sand.u32 %s157, 1
        %s598 = smul.addr %s597, 16
        %s599 = scalar_lea.vmem [#allocation7], %s598
        %s600 = sand.u32 %s185, 1
        %s601 = scalar_lea.sflag [#allocation9], %s600
        %s602 = sand.u32 %s185, 1
        %s603 = smul.addr %s602, 16
        %s604 = scalar_lea.vmem [#allocation8], %s603
        // Predicated region
        $region45: #{tpu_custom_call.1} parent=35 // pred_check
          %p605 = pneg %p167
        $region46: #{tpu_custom_call.1} parent=35 // pred_check_branch
          %607 = sbr.rel (%p605) target = $region48
        $region47: #{tpu_custom_call.1} parent=35 // pred_region
          %s608 = smul.u32 2, %s34
          %s610 = ssub.s32 256, 256
          %611 = vsyncadd %s596, %s610
          %s612 = smul.addr %s33, 2
          %s613 = sadd.s32 %s608, %s612
          %s614 = smul.addr %s613, 128
          %s615 = scalar_lea.hbm %s4, %s614
          %s617 = sshll.u32 %s599, 4
          %s618 = int_to_ptr.vmem [resolvable:$true] %s617
          %620 = dma.vmem_to_hbm [thread:$0]  %s618, 256, %s615, %s596
        $region48: #{tpu_custom_call.1} parent=35 // pred_fallthru
          _
        // Predicated region
        $region49: #{tpu_custom_call.1} parent=35 // pred_check
          %p621 = pneg %p195
        $region50: #{tpu_custom_call.1} parent=35 // pred_check_branch
          %623 = sbr.rel (%p621) target = $region52
        $region51: #{tpu_custom_call.1} parent=35 // pred_region
          %s624 = smul.u32 2, %s34
          %s626 = ssub.s32 256, 256
          %627 = vsyncadd %s601, %s626
          %s628 = smul.addr %s33, 2
          %s629 = sadd.s32 %s624, %s628
          %s630 = smul.addr %s629, 128
          %s631 = scalar_lea.hbm %s5, %s630
          %s633 = sshll.u32 %s604, 4
          %s634 = int_to_ptr.vmem [resolvable:$true] %s633
          %636 = dma.vmem_to_hbm [thread:$0]  %s634, 256, %s631, %s601
        $region52: #{tpu_custom_call.1} parent=35 // pred_fallthru
          _
      $region36: #{tpu_custom_call.1} parent=5 // pred_fallthru
        _
      %p637 = scmp.le.s32.totalorder 2, %s24
      // Predicated region
      $region53: #{tpu_custom_call.1} parent=5 // pred_check
        %p638 = pneg %p637
      $region54: #{tpu_custom_call.1} parent=5 // pred_check_branch
        %640 = sbr.rel (%p638) target = $region56
      $region55: #{tpu_custom_call.1} parent=5 // pred_region
        %s641 = ssub.s32 %s24, 2
        // Predicated region
        $region57: #{tpu_custom_call.1} parent=55 // pred_check
          %p642 = pneg %p173
        $region58: #{tpu_custom_call.1} parent=55 // pred_check_branch
          %644 = sbr.rel (%p642) target = $region60
        $region59: #{tpu_custom_call.1} parent=55 // pred_region
          %s645 = sand.u32 %s158, 1
          %s646 = scalar_lea.sflag [#allocation4], %s645
          %s647 = sand.u32 %s158, 1
          %s648 = smul.addr %s647, 16
          %s649 = scalar_lea.vmem [#allocation7], %s648
          %650 = dma.done %s646, 256
        $region60: #{tpu_custom_call.1} parent=55 // pred_fallthru
          _
        // Predicated region
        $region61: #{tpu_custom_call.1} parent=55 // pred_check
          %p651 = pneg %p201
        $region62: #{tpu_custom_call.1} parent=55 // pred_check_branch
          %653 = sbr.rel (%p651) target = $region64
        $region63: #{tpu_custom_call.1} parent=55 // pred_region
          %s654 = sand.u32 %s186, 1
          %s655 = scalar_lea.sflag [#allocation9], %s654
          %s656 = sand.u32 %s186, 1
          %s657 = smul.addr %s656, 16
          %s658 = scalar_lea.vmem [#allocation8], %s657
          %659 = dma.done %s655, 256
        $region64: #{tpu_custom_call.1} parent=55 // pred_fallthru
          _
      $region56: #{tpu_custom_call.1} parent=5 // pred_fallthru
        _
    $region6: #{tpu_custom_call.1} parent=1 // loop_footer
      %s28 = sadd.s32 1, %s24
    $region7: #{tpu_custom_call.1} parent=1 // loop_footer_branch
      %23 = sbr.rel target = $region3
    $region8: #{tpu_custom_call.1} parent=1 // loop_exit
      _
    %660 = vsyncpa [#allocation3], 1
    %s661 = scalar_lea.sflag [#allocation3], 1
    %662 = vsyncpa %s661, 1
    %663 = vsyncpa [#allocation6], 1
    %s664 = scalar_lea.sflag [#allocation6], 1
    %665 = vsyncpa %s664, 1
    %666 = vsyncpa [#allocation4], 1
    %s667 = scalar_lea.sflag [#allocation4], 1
    %668 = vsyncpa %s667, 1
    %669 = vsyncpa [#allocation9], 1
    %s670 = scalar_lea.sflag [#allocation9], 1
    %671 = vsyncpa %s670, 1

</llo_original>
